<compile_context>
chip_gen: v5e
topology: v5e:2x2
jax: 0.10.0
libtpu: 0.0.40
codegen_flags: <defaults>
</compile_context>

<pallas_src>
import jax
import jax.numpy as jnp
from jax.experimental import pallas as pl
from jax.experimental.pallas import tpu as pltpu


def _linear_softplus_kernel(x_ref, p_ref, o_ref):
    # x_ref: (1, 3) f32 VMEM  -- features
    # p_ref: (1, 4) f32 VMEM  -- packed [W(1,3) | b(1,1)]
    # o_ref: (1, 1) f32 VMEM  -- softplus(x @ W.T + b)
    x = x_ref[...]            # (1, 3)
    w = p_ref[:, :3]          # (1, 3)
    b = p_ref[:, 3:4]         # (1, 1)
    # 3-MAC inner product on the VPU + one lane reduce (Mosaic masks the
    # padded lanes of the logical (1,3) tile automatically).
    z = jnp.sum(x * w, axis=-1, keepdims=True) + b
    # numerically stable softplus: max(z, 0) + log1p(exp(-|z|))  (EUP ops)
    sp = jnp.maximum(z, 0.0) + jnp.log1p(jnp.exp(-jnp.abs(z)))
    o_ref[...] = sp.astype(o_ref.dtype)


def pack_params(weight, bias):
    """Pack nn.Linear(3,1) params once at init: weight (1,3) + bias (1,) -> (1,4)."""
    return jnp.concatenate(
        [weight.astype(jnp.float32), bias.reshape(1, 1).astype(jnp.float32)],
        axis=1,
    )


def linear_decision_forward(features, packed_params):
    """features: (1, 3) f32; packed_params: (1, 4) f32 -> (1,) f32."""
    out = pl.pallas_call(
        _linear_softplus_kernel,
        out_shape=jax.ShapeDtypeStruct((1, 1), jnp.float32),
        in_specs=[
            pl.BlockSpec(memory_space=pltpu.MemorySpace.VMEM),  # features (1,3)
            pl.BlockSpec(memory_space=pltpu.MemorySpace.VMEM),  # packed params (1,4)
        ],
        out_specs=pl.BlockSpec(memory_space=pltpu.MemorySpace.VMEM),
        # 3 mul + 2 add (reduce) + 1 bias add + 1 max = 7 flops;
        # exp + log1p = 2 transcendentals; (3+4+1)*4 = 32 -> ~36 bytes.
        cost_estimate=pl.CostEstimate(flops=7, transcendentals=2, bytes_accessed=36),
    )(features, packed_params)
    # matches torch's .view(-1) on the (1, 1) linear output -> (1,)
    return out.reshape(-1)


# jit the forward so the output reshape fuses away and per-call dispatch
# overhead is a single executable.
linear_decision_forward = jax.jit(linear_decision_forward)


if __name__ == "__main__":
    key = jax.random.PRNGKey(0)
    k_x, k_w, k_b = jax.random.split(key, 3)

    # deterministic parameter init (nn.Linear(3, 1): weight (1,3), bias (1,))
    bound = 1.0 / jnp.sqrt(3.0)
    weight = jax.random.uniform(k_w, (1, 3), jnp.float32, -bound, bound)
    bias = jax.random.uniform(k_b, (1,), jnp.float32, -bound, bound)

    features = jax.random.normal(k_x, (1, 3), jnp.float32)

    # pack once at init (not per call)
    packed = pack_params(weight, bias)

    out = linear_decision_forward(features, packed)
    out = jax.block_until_ready(out)

    # reference check in plain JAX
    ref = jax.nn.softplus(features @ weight.T + bias).reshape(-1)
    assert out.shape == (1,), out.shape
    assert jnp.allclose(out, ref, atol=1e-5), (out, ref)

    print("KERNEL_OK")
</pallas_src>

<mosaic_0001>
module attributes {stable_mosaic.version = 11 : i64} {
  func.func @_linear_softplus_kernel(%arg0: memref<1x3xf32, #tpu.memory_space<vmem>>, %arg1: memref<1x4xf32, #tpu.memory_space<vmem>>, %arg2: memref<1x1xf32, #tpu.memory_space<vmem>>) attributes {dimension_semantics = [], scalar_prefetch = 0 : i64, scratch_operands = 0 : i64, tpu.core_type = #tpu.core_type<tc>} {
    %c0 = arith.constant 0 : index
    %c0_0 = arith.constant 0 : index
    %0 = vector.load %arg0[%c0, %c0_0] : memref<1x3xf32, #tpu.memory_space<vmem>>, vector<1x3xf32>
    %c0_1 = arith.constant 0 : index
    %c0_2 = arith.constant 0 : index
    %1 = vector.load %arg1[%c0_1, %c0_2] : memref<1x4xf32, #tpu.memory_space<vmem>>, vector<1x3xf32>
    %c0_3 = arith.constant 0 : index
    %c3 = arith.constant 3 : index
    %2 = vector.load %arg1[%c0_3, %c3] : memref<1x4xf32, #tpu.memory_space<vmem>>, vector<1x1xf32>
    %3 = arith.mulf %0, %1 : vector<1x3xf32>
    %cst = arith.constant dense<0.000000e+00> : vector<1xf32>
    %4 = vector.multi_reduction <add>, %3, %cst [1] : vector<1x3xf32> to vector<1xf32>
    %5 = vector.shape_cast %4 : vector<1xf32> to vector<1x1xf32>
    %6 = arith.addf %5, %2 : vector<1x1xf32>
    %cst_4 = arith.constant 0.000000e+00 : f32
    %7 = vector.broadcast %cst_4 : f32 to vector<1x1xf32>
    %8 = arith.maximumf %6, %7 : vector<1x1xf32>
    %9 = math.absf %6 : vector<1x1xf32>
    %cst_5 = arith.constant 0.000000e+00 : f32
    %10 = vector.broadcast %cst_5 : f32 to vector<1x1xf32>
    %11 = arith.subf %10, %9 : vector<1x1xf32>
    %12 = math.exp %11 : vector<1x1xf32>
    %13 = math.log1p %12 : vector<1x1xf32>
    %14 = arith.addf %8, %13 : vector<1x1xf32>
    %c0_6 = arith.constant 0 : index
    %c0_7 = arith.constant 0 : index
    %15 = vector.load %arg2[%c0_6, %c0_7] : memref<1x1xf32, #tpu.memory_space<vmem>>, vector<1x1xf32>
    tpu.vector_store %arg2[%c0_6, %c0_7], %14 {strides = array<i32>} : memref<1x1xf32, #tpu.memory_space<vmem>>, vector<1x1xf32>,
    return
  }
}

</mosaic_0001>

<llo_original>
// kernel: linear_decision_forward.1
$region0: #{linear_decision_forward.1}
  #allocation0 [shape = 'u32[]', space=smem, size = 0x4, offset = 0x4, fixed_abs, tag = 'smem constant byte address 0x4 - core index']
  #allocation1 [shape = 'u32[72,128]{1,0:T(1,128)}', space=vmem, size = 0x9000, scoped, tag = 'internal scratch']
  %s0 = inlined_call_operand.hbm [shape: f32[1,3], index: 0, kind: input, shape index: {}]
  %s1 = inlined_call_operand.hbm [shape: f32[1,4], index: 1, kind: input, shape index: {}]
  %s2 = inlined_call_operand.hbm [shape: f32[1,1], index: 2, kind: output, shape index: {}]
  %s3 = sld [smem:[#allocation0]]
  $region26: #{linear_decision_forward.1} parent=0
    _
  %s5 = ssub.s32 1, %s3
  %s6 = scalar_select 0, %s5, %s3
  $region1: #{linear_decision_forward.1} parent=0
    #allocation2 [shape = 'u8[512]{0}', space=vmem, size = 0x400, scoped, tag = 'input window, operand 0, single buffered']
    #allocation3 [shape = 's32[1]{0}', space=sflag, size = 0x4, scoped, tag = 'scoped memory for linear_decision_forward.1']
    #allocation4 [shape = 's32[1]{0}', space=sflag, size = 0x4, scoped, tag = 'scoped memory for linear_decision_forward.1']
    #allocation5 [shape = 'u8[512]{0}', space=vmem, size = 0x400, scoped, tag = 'input window, operand 1, single buffered']
    #allocation6 [shape = 's32[1]{0}', space=sflag, size = 0x4, scoped, tag = 'scoped memory for linear_decision_forward.1']
    #allocation7 [shape = 'u8[512]{0}', space=vmem, size = 0x400, scoped, tag = 'output window, operand 0, single buffered']
    %7 = vsyncpa [#allocation3], 0
    %8 = vsyncpa [#allocation6], 0
    %9 = vsyncpa [#allocation4], 0
    // Predicated region
    $region2: #{linear_decision_forward.1} parent=1 // pred_check
      _
    $region3: #{linear_decision_forward.1} parent=1 // pred_check_branch
      %11 = sbr.rel (0) target = $region5
    $region4: #{linear_decision_forward.1} parent=1 // pred_region
      %13 = vsyncadd [#allocation3], 0
      %s15 = sshll.u32 %s0, 4
      %s16 = int_to_ptr.hbm [resolvable:$true] %s15
      %s17 = sshll.u32 [#allocation2], 4
      %s18 = int_to_ptr.vmem [resolvable:$true] %s17
      %20 = dma.hbm_to_vmem [thread:$0]  %s16, 16, %s18, [#allocation3]
    $region5: #{linear_decision_forward.1} parent=1 // pred_fallthru
      _
    // Predicated region
    $region6: #{linear_decision_forward.1} parent=1 // pred_check
      _
    $region7: #{linear_decision_forward.1} parent=1 // pred_check_branch
      %22 = sbr.rel (0) target = $region9
    $region8: #{linear_decision_forward.1} parent=1 // pred_region
      %24 = vsyncadd [#allocation6], 0
      %s26 = sshll.u32 %s1, 4
      %s27 = int_to_ptr.hbm [resolvable:$true] %s26
      %s28 = sshll.u32 [#allocation5], 4
      %s29 = int_to_ptr.vmem [resolvable:$true] %s28
      %31 = dma.hbm_to_vmem [thread:$0]  %s27, 16, %s29, [#allocation6]
    $region9: #{linear_decision_forward.1} parent=1 // pred_fallthru
      _
    // Predicated region
    $region10: #{linear_decision_forward.1} parent=1 // pred_check
      _
    $region11: #{linear_decision_forward.1} parent=1 // pred_check_branch
      %33 = sbr.rel (0) target = $region13
    $region12: #{linear_decision_forward.1} parent=1 // pred_region
      %35 = dma.done [#allocation3], 16
    $region13: #{linear_decision_forward.1} parent=1 // pred_fallthru
      _
    // Predicated region
    $region14: #{linear_decision_forward.1} parent=1 // pred_check
      _
    $region15: #{linear_decision_forward.1} parent=1 // pred_check_branch
      %37 = sbr.rel (0) target = $region17
    $region16: #{linear_decision_forward.1} parent=1 // pred_region
      %39 = dma.done [#allocation6], 16
    $region17: #{linear_decision_forward.1} parent=1 // pred_fallthru
      _
    %v40 = vld [vmem:[#allocation2] sm:$0x1]
    %v41 = vld [vmem:[#allocation5] sm:$0x1]
    %v42 = vmul.f32 %v40, %v41
    %vm43 = vcmask 16384
    %v44 = vsel %vm43, %v42, 0.0
    %45 = vadd.xlane.f32.xlu0 %v44
    %v46 = vpop.xlane.xlu0 %45
    %v48 = vperm.slane %v41, 0
    %49 = vrot.lane.b32.xlu0 %v48, 125
    %v50 = vpop.permute.xlu0 %49
    %v52 = vadd.f32 %v46, %v50
    %v53 = vmax.f32 %v52, 0.0
    %v54 = vand.u32 2147483647, %v52
    %v55 = vsub.f32 0.0, %v54
    %v56 = vmul.f32 %v55, 1.442695
    %v57 = vpow.pop %v56
    %v58 = vadd.f32 %v57, 1.0
    %v59 = vlog2.pop %v58
    %v60 = vmul.f32 %v59, 0.6931472
    %v61 = vmul.f32 -0.5, %v57
    %v62 = vadd.f32 %v61, 1.0
    %v63 = vmul.f32 %v62, %v57
    %v64 = vand.u32 2147483647, %v57
    %vm65 = vcmp.lt.f32.partialorder %v64, 0.0004427343
    %v66 = vsel %vm65, %v63, %v60
    %v67 = vadd.f32 %v53, %v66
    %vm68 = vcmask 0
    %69 = vst.msk [vmem:[#allocation7] sm:$0x1] %vm68, %v67
    // Predicated region
    $region18: #{linear_decision_forward.1} parent=1 // pred_check
      _
    $region19: #{linear_decision_forward.1} parent=1 // pred_check_branch
      %71 = sbr.rel (0) target = $region21
    $region20: #{linear_decision_forward.1} parent=1 // pred_region
      %73 = vsyncadd [#allocation4], 0
      %s75 = sshll.u32 [#allocation7], 4
      %s76 = int_to_ptr.vmem [resolvable:$true] %s75
      %s77 = sshll.u32 %s2, 4
      %s78 = int_to_ptr.hbm [resolvable:$true] %s77
      %80 = dma.vmem_to_hbm [thread:$0]  %s76, 16, %s78, [#allocation4]
    $region21: #{linear_decision_forward.1} parent=1 // pred_fallthru
      _
    // Predicated region
    $region22: #{linear_decision_forward.1} parent=1 // pred_check
      _
    $region23: #{linear_decision_forward.1} parent=1 // pred_check_branch
      %82 = sbr.rel (0) target = $region25
    $region24: #{linear_decision_forward.1} parent=1 // pred_region
      %84 = dma.done [#allocation4], 16
    $region25: #{linear_decision_forward.1} parent=1 // pred_fallthru
      _
    %85 = vsyncpa [#allocation3], 1
    %86 = vsyncpa [#allocation6], 1
    %87 = vsyncpa [#allocation4], 1

</llo_original>
